<compile_context>
chip_gen: v5e
topology: v5e:2x2
jax: 0.10.0
libtpu: 0.0.40
codegen_flags: <defaults>
</compile_context>

<pallas_src>
import jax
import jax.numpy as jnp
from jax.experimental import pallas as pl
from jax.experimental.pallas import tpu as pltpu

LRELU_SLOPE = 0.01
BN_EPS = 1e-5

_HIDDEN = (512, 256, 128, 64)   # F_out of the four BN'd layers
_PACK_LANES = 512               # lane width of the packed per-feature-vector slab
_PACK_ROWS = 16                 # 9 rows used, padded to a sublane multiple


# ---------------- fused Pallas kernel (all 5 layers) ----------------

def _encoder_fused_kernel(x_ref,
                          w1_ref, w2_ref, w3_ref, w4_ref, w5_ref,
                          pvec_ref, o_ref):
    d_out = w5_ref.shape[1]
    h = x_ref[...]                                   # f32 [B, d_in]

    # 4x (Linear [bias dropped: cancels under BN] -> BatchNorm1d -> LeakyReLU).
    # Python loop unrolls at trace time (each layer has different shapes).
    for i, w_ref in enumerate((w1_ref, w2_ref, w3_ref, w4_ref)):
        f = _HIDDEN[i]

        # bf16 x bf16 -> f32 accumulation on the MXU; activations stay f32.
        y = jnp.dot(h.astype(jnp.bfloat16), w_ref[...],
                    preferred_element_type=jnp.float32)          # [B, f] f32

        # BatchNorm1d (training mode, biased variance), single-pass moments:
        #   var = E[y^2] - E[y]^2.  Slightly less stable than the two-pass
        #   form, but y is O(1) here so the f32 rounding is << eps=1e-5;
        #   the max() guards against a tiny negative from cancellation.
        mean = jnp.mean(y, axis=0, keepdims=True)                # [1, f]
        ex2 = jnp.mean(y * y, axis=0, keepdims=True)             # [1, f]
        var = jnp.maximum(ex2 - mean * mean, 0.0)                # [1, f]

        gamma = pvec_ref[2 * i:2 * i + 1, :f]                    # [1, f]
        beta = pvec_ref[2 * i + 1:2 * i + 2, :f]                 # [1, f]
        scale = gamma * jax.lax.rsqrt(var + BN_EPS)              # [1, f]
        shift = beta - mean * scale                              # [1, f]
        y_bn = y * scale + shift                                 # [B, f]

        # LeakyReLU(0.01) == max(y, 0.01*y) since 0 < slope < 1.
        h = jnp.maximum(y_bn, LRELU_SLOPE * y_bn)

    # Final Linear (keeps its bias, no BN / activation).  [B, d_out] output is
    # a sub-128-lane masked store; not worth padding at this size.
    b5 = pvec_ref[8:9, :d_out]                                   # [1, d_out]
    o_ref[...] = jnp.dot(h.astype(jnp.bfloat16), w5_ref[...],
                         preferred_element_type=jnp.float32) + b5


# ---------------- one-time parameter repack ----------------

def pack_encoder_params(params):
    """Repack once (not per forward): bf16 weights + one f32[16,512] slab
    holding [g1, be1, g2, be2, g3, be3, g4, be4, b5] one per row (lane-padded)."""
    (w1, _b1, g1, be1), (w2, _b2, g2, be2), (w3, _b3, g3, be3), (w4, _b4, g4, be4) = params[:4]
    w5, b5 = params[4]

    ws = tuple(w.astype(jnp.bfloat16) for w in (w1, w2, w3, w4, w5))

    pvec = jnp.zeros((_PACK_ROWS, _PACK_LANES), dtype=jnp.float32)
    for r, v in enumerate((g1, be1, g2, be2, g3, be3, g4, be4, b5)):
        v = jnp.asarray(v, dtype=jnp.float32).reshape(-1)
        pvec = pvec.at[r, : v.shape[0]].set(v)

    return ws + (pvec,)


# ---------------- wrapper ----------------

_VMEM_SPEC = pl.BlockSpec(memory_space=pltpu.MemorySpace.VMEM)


def encoder_forward(packed, x):
    """packed: output of pack_encoder_params;  x: [B, d_in] float32."""
    w1, w2, w3, w4, w5, pvec = packed
    B = x.shape[0]
    d_out = w5.shape[1]

    return pl.pallas_call(
        _encoder_fused_kernel,
        out_shape=jax.ShapeDtypeStruct((B, d_out), jnp.float32),
        in_specs=[_VMEM_SPEC] * 7,
        out_specs=_VMEM_SPEC,
    )(x, w1, w2, w3, w4, w5, pvec)


# ---------------- parameter init (kaiming_normal_, fan_in, a=0; bias=0) -------

def init_encoder_params(key, d_in, d_out):
    dims = [d_in, 512, 256, 128, 64, d_out]
    params = []
    keys = jax.random.split(key, len(dims) - 1)
    for i in range(len(dims) - 1):
        fan_in, fan_out = dims[i], dims[i + 1]
        std = (2.0 / fan_in) ** 0.5  # kaiming_normal_, a=0, mode='fan_in'
        w = std * jax.random.normal(keys[i], (fan_in, fan_out), dtype=jnp.float32)
        b = jnp.zeros((1, fan_out), dtype=jnp.float32)  # PyTorch init zeroes biases
        if i < 4:
            gamma = jnp.ones((1, fan_out), dtype=jnp.float32)
            beta = jnp.zeros((1, fan_out), dtype=jnp.float32)
            params.append((w, b, gamma, beta))
        else:
            params.append((w, b))
    return params


# ---------------- pure-JAX reference (full PyTorch formula, f32, incl. biases) -

def encoder_forward_ref(params, x):
    h = x
    for w, b, g, beta in params[:4]:
        y = h @ w + b  # bias kept here; it cancels under BN (proves kernel equivalence)
        mean = jnp.mean(y, axis=0, keepdims=True)
        var = jnp.mean((y - mean) ** 2, axis=0, keepdims=True)
        y = (y - mean) * jax.lax.rsqrt(var + BN_EPS) * g + beta
        h = jnp.where(y >= 0.0, y, LRELU_SLOPE * y)
    w, b = params[4]
    return h @ w + b


if __name__ == "__main__":
    key = jax.random.PRNGKey(0)
    k_param, k_x = jax.random.split(key)

    B, d_in, d_out = 8, 32, 16
    params = init_encoder_params(k_param, d_in, d_out)
    packed = pack_encoder_params(params)          # one-time repack (bf16 weights)
    x = jax.random.normal(k_x, (B, d_in), dtype=jnp.float32)

    out = encoder_forward(packed, x)
    out = jax.block_until_ready(out)

    ref = encoder_forward_ref(params, x)          # full-precision f32 reference
    assert out.shape == (B, d_out)
    # Tolerance loosened vs. the all-f32 version: weights (MXU operands) are bf16.
    assert jnp.allclose(out, ref, atol=5e-2, rtol=5e-2)

    print("KERNEL_OK")
</pallas_src>

<mosaic_0001>
module attributes {stable_mosaic.version = 11 : i64} {
  func.func @_encoder_fused_kernel(%arg0: memref<8x32xf32, #tpu.memory_space<vmem>>, %arg1: memref<32x512xbf16, #tpu.memory_space<vmem>>, %arg2: memref<512x256xbf16, #tpu.memory_space<vmem>>, %arg3: memref<256x128xbf16, #tpu.memory_space<vmem>>, %arg4: memref<128x64xbf16, #tpu.memory_space<vmem>>, %arg5: memref<64x16xbf16, #tpu.memory_space<vmem>>, %arg6: memref<16x512xf32, #tpu.memory_space<vmem>>, %arg7: memref<8x16xf32, #tpu.memory_space<vmem>>) attributes {dimension_semantics = [], scalar_prefetch = 0 : i64, scratch_operands = 0 : i64, tpu.core_type = #tpu.core_type<tc>} {
    %c0 = arith.constant 0 : index
    %c0_0 = arith.constant 0 : index
    %0 = vector.load %arg0[%c0, %c0_0] : memref<8x32xf32, #tpu.memory_space<vmem>>, vector<8x32xf32>
    %1 = arith.truncf %0 : vector<8x32xf32> to vector<8x32xbf16>
    %c0_1 = arith.constant 0 : index
    %c0_2 = arith.constant 0 : index
    %2 = vector.load %arg1[%c0_1, %c0_2] : memref<32x512xbf16, #tpu.memory_space<vmem>>, vector<32x512xbf16>
    %cst = arith.constant dense<0.000000e+00> : vector<8x512xf32>
    %3 = tpu.matmul %1, %2, %cst {dimension_numbers = #tpu.dot_dimension_numbers<[1], [0], [0], [1], [0, 0, 1, 1], [], []>} : vector<8x32xbf16>, vector<32x512xbf16>, vector<8x512xf32> -> vector<8x512xf32>
    %cst_3 = arith.constant dense<0.000000e+00> : vector<512xf32>
    %4 = vector.multi_reduction <add>, %3, %cst_3 [0] : vector<8x512xf32> to vector<512xf32>
    %5 = vector.shape_cast %4 : vector<512xf32> to vector<1x512xf32>
    %cst_4 = arith.constant 8.000000e+00 : f32
    %6 = vector.broadcast %cst_4 : f32 to vector<1x512xf32>
    %7 = arith.divf %5, %6 : vector<1x512xf32>
    %8 = arith.mulf %3, %3 : vector<8x512xf32>
    %cst_5 = arith.constant dense<0.000000e+00> : vector<512xf32>
    %9 = vector.multi_reduction <add>, %8, %cst_5 [0] : vector<8x512xf32> to vector<512xf32>
    %10 = vector.shape_cast %9 : vector<512xf32> to vector<1x512xf32>
    %cst_6 = arith.constant 8.000000e+00 : f32
    %11 = vector.broadcast %cst_6 : f32 to vector<1x512xf32>
    %12 = arith.divf %10, %11 : vector<1x512xf32>
    %13 = arith.mulf %7, %7 : vector<1x512xf32>
    %14 = arith.subf %12, %13 : vector<1x512xf32>
    %cst_7 = arith.constant 0.000000e+00 : f32
    %15 = vector.broadcast %cst_7 : f32 to vector<1x512xf32>
    %16 = arith.maximumf %14, %15 : vector<1x512xf32>
    %c0_8 = arith.constant 0 : index
    %c0_9 = arith.constant 0 : index
    %17 = vector.load %arg6[%c0_8, %c0_9] : memref<16x512xf32, #tpu.memory_space<vmem>>, vector<1x512xf32>
    %c1 = arith.constant 1 : index
    %c0_10 = arith.constant 0 : index
    %18 = vector.load %arg6[%c1, %c0_10] : memref<16x512xf32, #tpu.memory_space<vmem>>, vector<1x512xf32>
    %cst_11 = arith.constant 9.99999974E-6 : f32
    %19 = vector.broadcast %cst_11 : f32 to vector<1x512xf32>
    %20 = arith.addf %16, %19 : vector<1x512xf32>
    %21 = math.rsqrt %20 : vector<1x512xf32>
    %22 = arith.mulf %17, %21 : vector<1x512xf32>
    %23 = arith.mulf %7, %22 : vector<1x512xf32>
    %24 = arith.subf %18, %23 : vector<1x512xf32>
    %25 = vector.broadcast %22 : vector<1x512xf32> to vector<8x512xf32>
    %26 = arith.mulf %3, %25 : vector<8x512xf32>
    %27 = vector.broadcast %24 : vector<1x512xf32> to vector<8x512xf32>
    %28 = arith.addf %26, %27 : vector<8x512xf32>
    %cst_12 = arith.constant 0.00999999977 : f32
    %29 = vector.broadcast %cst_12 : f32 to vector<8x512xf32>
    %30 = arith.mulf %29, %28 : vector<8x512xf32>
    %31 = arith.maximumf %28, %30 : vector<8x512xf32>
    %32 = arith.truncf %31 : vector<8x512xf32> to vector<8x512xbf16>
    %c0_13 = arith.constant 0 : index
    %c0_14 = arith.constant 0 : index
    %33 = vector.load %arg2[%c0_13, %c0_14] : memref<512x256xbf16, #tpu.memory_space<vmem>>, vector<512x256xbf16>
    %cst_15 = arith.constant dense<0.000000e+00> : vector<8x256xf32>
    %34 = tpu.matmul %32, %33, %cst_15 {dimension_numbers = #tpu.dot_dimension_numbers<[1], [0], [0], [1], [0, 0, 1, 1], [], []>} : vector<8x512xbf16>, vector<512x256xbf16>, vector<8x256xf32> -> vector<8x256xf32>
    %cst_16 = arith.constant dense<0.000000e+00> : vector<256xf32>
    %35 = vector.multi_reduction <add>, %34, %cst_16 [0] : vector<8x256xf32> to vector<256xf32>
    %36 = vector.shape_cast %35 : vector<256xf32> to vector<1x256xf32>
    %cst_17 = arith.constant 8.000000e+00 : f32
    %37 = vector.broadcast %cst_17 : f32 to vector<1x256xf32>
    %38 = arith.divf %36, %37 : vector<1x256xf32>
    %39 = arith.mulf %34, %34 : vector<8x256xf32>
    %cst_18 = arith.constant dense<0.000000e+00> : vector<256xf32>
    %40 = vector.multi_reduction <add>, %39, %cst_18 [0] : vector<8x256xf32> to vector<256xf32>
    %41 = vector.shape_cast %40 : vector<256xf32> to vector<1x256xf32>
    %cst_19 = arith.constant 8.000000e+00 : f32
    %42 = vector.broadcast %cst_19 : f32 to vector<1x256xf32>
    %43 = arith.divf %41, %42 : vector<1x256xf32>
    %44 = arith.mulf %38, %38 : vector<1x256xf32>
    %45 = arith.subf %43, %44 : vector<1x256xf32>
    %cst_20 = arith.constant 0.000000e+00 : f32
    %46 = vector.broadcast %cst_20 : f32 to vector<1x256xf32>
    %47 = arith.maximumf %45, %46 : vector<1x256xf32>
    %c2 = arith.constant 2 : index
    %c0_21 = arith.constant 0 : index
    %48 = vector.load %arg6[%c2, %c0_21] : memref<16x512xf32, #tpu.memory_space<vmem>>, vector<1x256xf32>
    %c3 = arith.constant 3 : index
    %c0_22 = arith.constant 0 : index
    %49 = vector.load %arg6[%c3, %c0_22] : memref<16x512xf32, #tpu.memory_space<vmem>>, vector<1x256xf32>
    %cst_23 = arith.constant 9.99999974E-6 : f32
    %50 = vector.broadcast %cst_23 : f32 to vector<1x256xf32>
    %51 = arith.addf %47, %50 : vector<1x256xf32>
    %52 = math.rsqrt %51 : vector<1x256xf32>
    %53 = arith.mulf %48, %52 : vector<1x256xf32>
    %54 = arith.mulf %38, %53 : vector<1x256xf32>
    %55 = arith.subf %49, %54 : vector<1x256xf32>
    %56 = vector.broadcast %53 : vector<1x256xf32> to vector<8x256xf32>
    %57 = arith.mulf %34, %56 : vector<8x256xf32>
    %58 = vector.broadcast %55 : vector<1x256xf32> to vector<8x256xf32>
    %59 = arith.addf %57, %58 : vector<8x256xf32>
    %cst_24 = arith.constant 0.00999999977 : f32
    %60 = vector.broadcast %cst_24 : f32 to vector<8x256xf32>
    %61 = arith.mulf %60, %59 : vector<8x256xf32>
    %62 = arith.maximumf %59, %61 : vector<8x256xf32>
    %63 = arith.truncf %62 : vector<8x256xf32> to vector<8x256xbf16>
    %c0_25 = arith.constant 0 : index
    %c0_26 = arith.constant 0 : index
    %64 = vector.load %arg3[%c0_25, %c0_26] : memref<256x128xbf16, #tpu.memory_space<vmem>>, vector<256x128xbf16>
    %cst_27 = arith.constant dense<0.000000e+00> : vector<8x128xf32>
    %65 = tpu.matmul %63, %64, %cst_27 {dimension_numbers = #tpu.dot_dimension_numbers<[1], [0], [0], [1], [0, 0, 1, 1], [], []>} : vector<8x256xbf16>, vector<256x128xbf16>, vector<8x128xf32> -> vector<8x128xf32>
    %cst_28 = arith.constant dense<0.000000e+00> : vector<128xf32>
    %66 = vector.multi_reduction <add>, %65, %cst_28 [0] : vector<8x128xf32> to vector<128xf32>
    %67 = vector.shape_cast %66 : vector<128xf32> to vector<1x128xf32>
    %cst_29 = arith.constant 8.000000e+00 : f32
    %68 = vector.broadcast %cst_29 : f32 to vector<1x128xf32>
    %69 = arith.divf %67, %68 : vector<1x128xf32>
    %70 = arith.mulf %65, %65 : vector<8x128xf32>
    %cst_30 = arith.constant dense<0.000000e+00> : vector<128xf32>
    %71 = vector.multi_reduction <add>, %70, %cst_30 [0] : vector<8x128xf32> to vector<128xf32>
    %72 = vector.shape_cast %71 : vector<128xf32> to vector<1x128xf32>
    %cst_31 = arith.constant 8.000000e+00 : f32
    %73 = vector.broadcast %cst_31 : f32 to vector<1x128xf32>
    %74 = arith.divf %72, %73 : vector<1x128xf32>
    %75 = arith.mulf %69, %69 : vector<1x128xf32>
    %76 = arith.subf %74, %75 : vector<1x128xf32>
    %cst_32 = arith.constant 0.000000e+00 : f32
    %77 = vector.broadcast %cst_32 : f32 to vector<1x128xf32>
    %78 = arith.maximumf %76, %77 : vector<1x128xf32>
    %c4 = arith.constant 4 : index
    %c0_33 = arith.constant 0 : index
    %79 = vector.load %arg6[%c4, %c0_33] : memref<16x512xf32, #tpu.memory_space<vmem>>, vector<1x128xf32>
    %c5 = arith.constant 5 : index
    %c0_34 = arith.constant 0 : index
    %80 = vector.load %arg6[%c5, %c0_34] : memref<16x512xf32, #tpu.memory_space<vmem>>, vector<1x128xf32>
    %cst_35 = arith.constant 9.99999974E-6 : f32
    %81 = vector.broadcast %cst_35 : f32 to vector<1x128xf32>
    %82 = arith.addf %78, %81 : vector<1x128xf32>
    %83 = math.rsqrt %82 : vector<1x128xf32>
    %84 = arith.mulf %79, %83 : vector<1x128xf32>
    %85 = arith.mulf %69, %84 : vector<1x128xf32>
    %86 = arith.subf %80, %85 : vector<1x128xf32>
    %87 = vector.broadcast %84 : vector<1x128xf32> to vector<8x128xf32>
    %88 = arith.mulf %65, %87 : vector<8x128xf32>
    %89 = vector.broadcast %86 : vector<1x128xf32> to vector<8x128xf32>
    %90 = arith.addf %88, %89 : vector<8x128xf32>
    %cst_36 = arith.constant 0.00999999977 : f32
    %91 = vector.broadcast %cst_36 : f32 to vector<8x128xf32>
    %92 = arith.mulf %91, %90 : vector<8x128xf32>
    %93 = arith.maximumf %90, %92 : vector<8x128xf32>
    %94 = arith.truncf %93 : vector<8x128xf32> to vector<8x128xbf16>
    %c0_37 = arith.constant 0 : index
    %c0_38 = arith.constant 0 : index
    %95 = vector.load %arg4[%c0_37, %c0_38] : memref<128x64xbf16, #tpu.memory_space<vmem>>, vector<128x64xbf16>
    %cst_39 = arith.constant dense<0.000000e+00> : vector<8x64xf32>
    %96 = tpu.matmul %94, %95, %cst_39 {dimension_numbers = #tpu.dot_dimension_numbers<[1], [0], [0], [1], [0, 0, 1, 1], [], []>} : vector<8x128xbf16>, vector<128x64xbf16>, vector<8x64xf32> -> vector<8x64xf32>
    %cst_40 = arith.constant dense<0.000000e+00> : vector<64xf32>
    %97 = vector.multi_reduction <add>, %96, %cst_40 [0] : vector<8x64xf32> to vector<64xf32>
    %98 = vector.shape_cast %97 : vector<64xf32> to vector<1x64xf32>
    %cst_41 = arith.constant 8.000000e+00 : f32
    %99 = vector.broadcast %cst_41 : f32 to vector<1x64xf32>
    %100 = arith.divf %98, %99 : vector<1x64xf32>
    %101 = arith.mulf %96, %96 : vector<8x64xf32>
    %cst_42 = arith.constant dense<0.000000e+00> : vector<64xf32>
    %102 = vector.multi_reduction <add>, %101, %cst_42 [0] : vector<8x64xf32> to vector<64xf32>
    %103 = vector.shape_cast %102 : vector<64xf32> to vector<1x64xf32>
    %cst_43 = arith.constant 8.000000e+00 : f32
    %104 = vector.broadcast %cst_43 : f32 to vector<1x64xf32>
    %105 = arith.divf %103, %104 : vector<1x64xf32>
    %106 = arith.mulf %100, %100 : vector<1x64xf32>
    %107 = arith.subf %105, %106 : vector<1x64xf32>
    %cst_44 = arith.constant 0.000000e+00 : f32
    %108 = vector.broadcast %cst_44 : f32 to vector<1x64xf32>
    %109 = arith.maximumf %107, %108 : vector<1x64xf32>
    %c6 = arith.constant 6 : index
    %c0_45 = arith.constant 0 : index
    %110 = vector.load %arg6[%c6, %c0_45] : memref<16x512xf32, #tpu.memory_space<vmem>>, vector<1x64xf32>
    %c7 = arith.constant 7 : index
    %c0_46 = arith.constant 0 : index
    %111 = vector.load %arg6[%c7, %c0_46] : memref<16x512xf32, #tpu.memory_space<vmem>>, vector<1x64xf32>
    %cst_47 = arith.constant 9.99999974E-6 : f32
    %112 = vector.broadcast %cst_47 : f32 to vector<1x64xf32>
    %113 = arith.addf %109, %112 : vector<1x64xf32>
    %114 = math.rsqrt %113 : vector<1x64xf32>
    %115 = arith.mulf %110, %114 : vector<1x64xf32>
    %116 = arith.mulf %100, %115 : vector<1x64xf32>
    %117 = arith.subf %111, %116 : vector<1x64xf32>
    %118 = vector.broadcast %115 : vector<1x64xf32> to vector<8x64xf32>
    %119 = arith.mulf %96, %118 : vector<8x64xf32>
    %120 = vector.broadcast %117 : vector<1x64xf32> to vector<8x64xf32>
    %121 = arith.addf %119, %120 : vector<8x64xf32>
    %cst_48 = arith.constant 0.00999999977 : f32
    %122 = vector.broadcast %cst_48 : f32 to vector<8x64xf32>
    %123 = arith.mulf %122, %121 : vector<8x64xf32>
    %124 = arith.maximumf %121, %123 : vector<8x64xf32>
    %c8 = arith.constant 8 : index
    %c0_49 = arith.constant 0 : index
    %125 = vector.load %arg6[%c8, %c0_49] : memref<16x512xf32, #tpu.memory_space<vmem>>, vector<1x16xf32>
    %126 = arith.truncf %124 : vector<8x64xf32> to vector<8x64xbf16>
    %c0_50 = arith.constant 0 : index
    %c0_51 = arith.constant 0 : index
    %127 = vector.load %arg5[%c0_50, %c0_51] : memref<64x16xbf16, #tpu.memory_space<vmem>>, vector<64x16xbf16>
    %cst_52 = arith.constant dense<0.000000e+00> : vector<8x16xf32>
    %128 = tpu.matmul %126, %127, %cst_52 {dimension_numbers = #tpu.dot_dimension_numbers<[1], [0], [0], [1], [0, 0, 1, 1], [], []>} : vector<8x64xbf16>, vector<64x16xbf16>, vector<8x16xf32> -> vector<8x16xf32>
    %129 = vector.broadcast %125 : vector<1x16xf32> to vector<8x16xf32>
    %130 = arith.addf %128, %129 : vector<8x16xf32>
    %c0_53 = arith.constant 0 : index
    %c0_54 = arith.constant 0 : index
    %131 = vector.load %arg7[%c0_53, %c0_54] : memref<8x16xf32, #tpu.memory_space<vmem>>, vector<8x16xf32>
    tpu.vector_store %arg7[%c0_53, %c0_54], %130 {strides = array<i32>} : memref<8x16xf32, #tpu.memory_space<vmem>>, vector<8x16xf32>,
    return
  }
}

</mosaic_0001>

<llo_original>
// kernel: tpu_custom_call.1
$region0: #{tpu_custom_call.1}
  #allocation0 [shape = 'u32[]', space=smem, size = 0x4, offset = 0x4, fixed_abs, tag = 'smem constant byte address 0x4 - core index']
  #allocation1 [shape = 'u32[72,128]{1,0:T(1,128)}', space=vmem, size = 0x9000, scoped, tag = 'internal scratch']
  %s0 = inlined_call_operand.vmem [shape: f32[8,32], index: 0, kind: input, shape index: {}]
  %s1 = inlined_call_operand.vmem [shape: bf16[32,512], index: 1, kind: input, shape index: {}]
  %s2 = inlined_call_operand.hbm [shape: bf16[512,256], index: 2, kind: input, shape index: {}]
  %s3 = inlined_call_operand.hbm [shape: bf16[256,128], index: 3, kind: input, shape index: {}]
  %s4 = inlined_call_operand.vmem [shape: bf16[128,64], index: 4, kind: input, shape index: {}]
  %s5 = inlined_call_operand.vmem [shape: bf16[64,16], index: 5, kind: input, shape index: {}]
  %s6 = inlined_call_operand.hbm [shape: f32[16,512], index: 6, kind: input, shape index: {}]
  %s7 = inlined_call_operand.hbm [shape: f32[8,16], index: 7, kind: output, shape index: {}]
  %s8 = sld [smem:[#allocation0]]
  $region50: #{tpu_custom_call.1} parent=0
    _
  %s10 = ssub.s32 1, %s8
  %s11 = scalar_select 0, %s10, %s8
  $region1: #{tpu_custom_call.1} parent=0
    #allocation2 [shape = 'u8[262144]{0}', space=vmem, size = 0x40000, scoped, tag = 'input window, operand 2, single buffered']
    #allocation3 [shape = 's32[1]{0}', space=sflag, size = 0x4, scoped, tag = 'scoped memory for tpu_custom_call.1']
    #allocation4 [shape = 's32[1]{0}', space=sflag, size = 0x4, scoped, tag = 'scoped memory for tpu_custom_call.1']
    #allocation5 [shape = 'u8[65536]{0}', space=vmem, size = 0x10000, scoped, tag = 'input window, operand 3, single buffered']
    #allocation6 [shape = 's32[1]{0}', space=sflag, size = 0x4, scoped, tag = 'scoped memory for tpu_custom_call.1']
    #allocation7 [shape = 'u8[32768]{0}', space=vmem, size = 0x8000, scoped, tag = 'input window, operand 6, single buffered']
    #allocation8 [shape = 'u8[4096]{0}', space=vmem, size = 0x1000, scoped, tag = 'output window, operand 0, single buffered']
    %12 = vsyncpa [#allocation3], 0
    %13 = vsyncpa [#allocation6], 0
    %14 = vsyncpa [#allocation4], 0
    // Predicated region
    $region2: #{tpu_custom_call.1} parent=1 // pred_check
      _
    $region3: #{tpu_custom_call.1} parent=1 // pred_check_branch
      %16 = sbr.rel (0) target = $region5
    $region4: #{tpu_custom_call.1} parent=1 // pred_region
      _
    $region5: #{tpu_custom_call.1} parent=1 // pred_fallthru
      _
    // Predicated region
    $region6: #{tpu_custom_call.1} parent=1 // pred_check
      _
    $region7: #{tpu_custom_call.1} parent=1 // pred_check_branch
      %18 = sbr.rel (0) target = $region9
    $region8: #{tpu_custom_call.1} parent=1 // pred_region
      _
    $region9: #{tpu_custom_call.1} parent=1 // pred_fallthru
      _
    // Predicated region
    $region10: #{tpu_custom_call.1} parent=1 // pred_check
      _
    $region11: #{tpu_custom_call.1} parent=1 // pred_check_branch
      %20 = sbr.rel (0) target = $region13
    $region12: #{tpu_custom_call.1} parent=1 // pred_region
      %22 = vsyncadd [#allocation3], 0
      %s23 = sshll.u32 %s2, 4
      %s24 = int_to_ptr.hbm [resolvable:$true] %s23
      %s25 = sshll.u32 [#allocation2], 4
      %s26 = int_to_ptr.vmem [resolvable:$true] %s25
      %31 = dma.hbm_to_vmem [thread:$0]  %s24, 8192, %s26, [#allocation3], 128, 128, 8
    $region13: #{tpu_custom_call.1} parent=1 // pred_fallthru
      _
    // Predicated region
    $region14: #{tpu_custom_call.1} parent=1 // pred_check
      _
    $region15: #{tpu_custom_call.1} parent=1 // pred_check_branch
      %33 = sbr.rel (0) target = $region17
    $region16: #{tpu_custom_call.1} parent=1 // pred_region
      %35 = vsyncadd [#allocation6], 0
      %s36 = sshll.u32 %s3, 4
      %s37 = int_to_ptr.hbm [resolvable:$true] %s36
      %s38 = sshll.u32 [#allocation5], 4
      %s39 = int_to_ptr.vmem [resolvable:$true] %s38
      %44 = dma.hbm_to_vmem [thread:$0]  %s37, 2048, %s39, [#allocation6], 64, 64, 4
    $region17: #{tpu_custom_call.1} parent=1 // pred_fallthru
      _
    // Predicated region
    $region18: #{tpu_custom_call.1} parent=1 // pred_check
      _
    $region19: #{tpu_custom_call.1} parent=1 // pred_check_branch
      %46 = sbr.rel (0) target = $region21
    $region20: #{tpu_custom_call.1} parent=1 // pred_region
      _
    $region21: #{tpu_custom_call.1} parent=1 // pred_fallthru
      _
    // Predicated region
    $region22: #{tpu_custom_call.1} parent=1 // pred_check
      _
    $region23: #{tpu_custom_call.1} parent=1 // pred_check_branch
      %48 = sbr.rel (0) target = $region25
    $region24: #{tpu_custom_call.1} parent=1 // pred_region
      _
    $region25: #{tpu_custom_call.1} parent=1 // pred_fallthru
      _
    // Predicated region
    $region26: #{tpu_custom_call.1} parent=1 // pred_check
      _
    $region27: #{tpu_custom_call.1} parent=1 // pred_check_branch
      %50 = sbr.rel (0) target = $region29
    $region28: #{tpu_custom_call.1} parent=1 // pred_region
      %52 = vsyncadd [#allocation6], 0
      %s53 = sshll.u32 %s6, 4
      %s54 = int_to_ptr.hbm [resolvable:$true] %s53
      %s55 = sshll.u32 [#allocation7], 4
      %s56 = int_to_ptr.vmem [resolvable:$true] %s55
      %61 = dma.hbm_to_vmem [thread:$0]  %s54, 1024, %s56, [#allocation6], 512, 512, 32
    $region29: #{tpu_custom_call.1} parent=1 // pred_fallthru
      _
    // Predicated region
    $region30: #{tpu_custom_call.1} parent=1 // pred_check
      _
    $region31: #{tpu_custom_call.1} parent=1 // pred_check_branch
      %63 = sbr.rel (0) target = $region33
    $region32: #{tpu_custom_call.1} parent=1 // pred_region
      %65 = dma.done [#allocation3], 8192
    $region33: #{tpu_custom_call.1} parent=1 // pred_fallthru
      _
    // Predicated region
    $region34: #{tpu_custom_call.1} parent=1 // pred_check
      _
    $region35: #{tpu_custom_call.1} parent=1 // pred_check_branch
      %67 = sbr.rel (0) target = $region37
    $region36: #{tpu_custom_call.1} parent=1 // pred_region
      %69 = dma.done [#allocation6], 2048
    $region37: #{tpu_custom_call.1} parent=1 // pred_fallthru
      _
    // Predicated region
    $region38: #{tpu_custom_call.1} parent=1 // pred_check
      _
    $region39: #{tpu_custom_call.1} parent=1 // pred_check_branch
      %71 = sbr.rel (0) target = $region41
    $region40: #{tpu_custom_call.1} parent=1 // pred_region
      %73 = dma.done [#allocation6], 1024
    $region41: #{tpu_custom_call.1} parent=1 // pred_fallthru
      _
    %v75 = vld [vmem:[%s0] sm:$0xff]
    %v76 = vpack.c.bf16 %v75, %v75
    %v77 = vld [vmem:[%s1] sm:$0xff]
    %v78 = vld [vmem:[%s1 + $0x8] sm:$0xff]
    %v79 = vld [vmem:[%s1 + $0x10] sm:$0xff]
    %v80 = vld [vmem:[%s1 + $0x18] sm:$0xff]
    %v81 = vld [vmem:[%s1 + $0x20] sm:$0xff]
    %v82 = vld [vmem:[%s1 + $0x28] sm:$0xff]
    %v83 = vld [vmem:[%s1 + $0x30] sm:$0xff]
    %v84 = vld [vmem:[%s1 + $0x38] sm:$0xff]
    %v93 = vunpack.c.l.b16 %v77
    %v94 = vunpack.c.h.b16 %v77
    %v95 = vunpack.c.l.b16 %v78
    %v96 = vunpack.c.h.b16 %v78
    %v97 = vunpack.c.l.b16 %v79
    %v98 = vunpack.c.h.b16 %v79
    %v99 = vunpack.c.l.b16 %v80
    %v100 = vunpack.c.h.b16 %v80
    %v101 = vunpack.c.l.b16 %v81
    %v102 = vunpack.c.h.b16 %v81
    %v103 = vunpack.c.l.b16 %v82
    %v104 = vunpack.c.h.b16 %v82
    %v105 = vunpack.c.l.b16 %v83
    %v106 = vunpack.c.h.b16 %v83
    %v107 = vunpack.c.l.b16 %v84
    %v108 = vunpack.c.h.b16 %v84
    %v109 = vpack.c.b16 %v97, %v93
    %v110 = vpack.c.b16 %v98, %v94
    %v111 = vpack.c.b16 %v99, %v95
    %v112 = vpack.c.b16 %v100, %v96
    %v113 = vpack.c.b16 %v105, %v101
    %v114 = vpack.c.b16 %v106, %v102
    %v115 = vpack.c.b16 %v107, %v103
    %v116 = vpack.c.b16 %v108, %v104
    %vm125 = vcmask 261120
    %v127 = vsel %vm125, %v76, 0
    %129 = vmatpush.bf16.msra.mxu0 0
    %130 = vmatpush.bf16.msra.mxu0 0
    %131 = vmatpush.bf16.msra.mxu0 0
    %132 = vmatpush.bf16.msra.mxu0 0
    %133 = vmatpush.bf16.msra.mxu0 0
    %134 = vmatpush.bf16.msra.mxu0 0
    %135 = vmatpush.bf16.msra.mxu0 %v113
    %136 = vmatpush.bf16.msra.mxu0 %v109
    %137 = vmatmul.bf16.gmra.mxu0 %v127
    %v138 = vpop.f32.mrf.mxu0
    %v139 = vadd.f32 0.0, %v138
    %v140 = vpop.f32.mrf.mxu0
    %141 = vdwg.mxu0
    %142 = vmatpush.bf16.msra.mxu0 0
    %143 = vmatpush.bf16.msra.mxu0 0
    %144 = vmatpush.bf16.msra.mxu0 0
    %145 = vmatpush.bf16.msra.mxu0 0
    %146 = vmatpush.bf16.msra.mxu0 0
    %147 = vmatpush.bf16.msra.mxu0 0
    %148 = vmatpush.bf16.msra.mxu0 %v114
    %149 = vmatpush.bf16.msra.mxu0 %v110
    %150 = vmatmul.bf16.gmra.mxu0 %v127
    %v151 = vpop.f32.mrf.mxu0
    %v152 = vadd.f32 0.0, %v151
    %v153 = vpop.f32.mrf.mxu0
    %154 = vdwg.mxu0
    %155 = vmatpush.bf16.msra.mxu0 0
    %156 = vmatpush.bf16.msra.mxu0 0
    %157 = vmatpush.bf16.msra.mxu0 0
    %158 = vmatpush.bf16.msra.mxu0 0
    %159 = vmatpush.bf16.msra.mxu0 0
    %160 = vmatpush.bf16.msra.mxu0 0
    %161 = vmatpush.bf16.msra.mxu0 %v115
    %162 = vmatpush.bf16.msra.mxu0 %v111
    %163 = vmatmul.bf16.gmra.mxu0 %v127
    %v164 = vpop.f32.mrf.mxu0
    %v165 = vadd.f32 0.0, %v164
    %v166 = vpop.f32.mrf.mxu0
    %167 = vdwg.mxu0
    %168 = vmatpush.bf16.msra.mxu0 0
    %169 = vmatpush.bf16.msra.mxu0 0
    %170 = vmatpush.bf16.msra.mxu0 0
    %171 = vmatpush.bf16.msra.mxu0 0
    %172 = vmatpush.bf16.msra.mxu0 0
    %173 = vmatpush.bf16.msra.mxu0 0
    %174 = vmatpush.bf16.msra.mxu0 %v116
    %175 = vmatpush.bf16.msra.mxu0 %v112
    %176 = vmatmul.bf16.gmra.mxu0 %v127
    %v177 = vpop.f32.mrf.mxu0
    %v178 = vadd.f32 0.0, %v177
    %v179 = vpop.f32.mrf.mxu0
    %180 = vdwg.mxu0
    %v181 = vrot.slane %v139, 4
    %v182 = vadd.f32 %v139, %v181
    %v183 = vrot.slane %v182, 2
    %v184 = vadd.f32 %v182, %v183
    %v185 = vrot.slane %v184, 1
    %v186 = vadd.f32 %v184, %v185
    %v187 = vrot.slane %v152, 4
    %v188 = vadd.f32 %v152, %v187
    %v189 = vrot.slane %v188, 2
    %v190 = vadd.f32 %v188, %v189
    %v191 = vrot.slane %v190, 1
    %v192 = vadd.f32 %v190, %v191
    %v193 = vrot.slane %v165, 4
    %v194 = vadd.f32 %v165, %v193
    %v195 = vrot.slane %v194, 2
    %v196 = vadd.f32 %v194, %v195
    %v197 = vrot.slane %v196, 1
    %v198 = vadd.f32 %v196, %v197
    %v199 = vrot.slane %v178, 4
    %v200 = vadd.f32 %v178, %v199
    %v201 = vrot.slane %v200, 2
    %v202 = vadd.f32 %v200, %v201
    %v203 = vrot.slane %v202, 1
    %v204 = vadd.f32 %v202, %v203
    %v205 = vrcp.pop 8.0
    %v206 = vmul.f32 8.0, %v205
    %v207 = vsub.f32 1.0, %v206
    %v208 = vmul.f32 %v205, %v207
    %v209 = vadd.f32 %v205, %v208
    %vm210 = vweird.f32 %v205
    %v211 = vsel %vm210, %v205, %v209
    %v212 = vmul.f32 %v186, %v211
    %v213 = vmul.f32 %v192, %v211
    %v214 = vmul.f32 %v198, %v211
    %v215 = vmul.f32 %v204, %v211
    %v216 = vmul.f32 %v139, %v139
    %v217 = vmul.f32 %v152, %v152
    %v218 = vmul.f32 %v165, %v165
    %v219 = vmul.f32 %v178, %v178
    %v220 = vrot.slane %v216, 4
    %v221 = vadd.f32 %v216, %v220
    %v222 = vrot.slane %v221, 2
    %v223 = vadd.f32 %v221, %v222
    %v224 = vrot.slane %v223, 1
    %v225 = vadd.f32 %v223, %v224
    %v226 = vrot.slane %v217, 4
    %v227 = vadd.f32 %v217, %v226
    %v228 = vrot.slane %v227, 2
    %v229 = vadd.f32 %v227, %v228
    %v230 = vrot.slane %v229, 1
    %v231 = vadd.f32 %v229, %v230
    %v232 = vrot.slane %v218, 4
    %v233 = vadd.f32 %v218, %v232
    %v234 = vrot.slane %v233, 2
    %v235 = vadd.f32 %v233, %v234
    %v236 = vrot.slane %v235, 1
    %v237 = vadd.f32 %v235, %v236
    %v238 = vrot.slane %v219, 4
    %v239 = vadd.f32 %v219, %v238
    %v240 = vrot.slane %v239, 2
    %v241 = vadd.f32 %v239, %v240
    %v242 = vrot.slane %v241, 1
    %v243 = vadd.f32 %v241, %v242
    %v244 = vmul.f32 %v225, %v211
    %v245 = vmul.f32 %v231, %v211
    %v246 = vmul.f32 %v237, %v211
    %v247 = vmul.f32 %v243, %v211
    %v248 = vmul.f32 %v212, %v212
    %v249 = vmul.f32 %v213, %v213
    %v250 = vmul.f32 %v214, %v214
    %v251 = vmul.f32 %v215, %v215
    %v252 = vsub.f32 %v244, %v248
    %v253 = vsub.f32 %v245, %v249
    %v254 = vsub.f32 %v246, %v250
    %v255 = vsub.f32 %v247, %v251
    %v256 = vmax.f32 %v252, 0.0
    %v257 = vmax.f32 %v253, 0.0
    %v258 = vmax.f32 %v254, 0.0
    %v259 = vmax.f32 %v255, 0.0
    %v260 = vld [vmem:[#allocation7] ss:$8 sm:$0xf]
    %s261 = scalar_lea.vmem [#allocation7], 1
    %v262 = vld [vmem:[%s261] ss:$8 sm:$0xf]
    %v263 = vadd.f32 %v256, 1e-05
    %v264 = vadd.f32 %v257, 1e-05
    %v265 = vadd.f32 %v258, 1e-05
    %v266 = vadd.f32 %v259, 1e-05
    %v267 = vrsqrt.pop %v263
    %v268 = vmul.f32 %v267, %v263
    %v269 = vmul.f32 %v268, %v267
    %v270 = vmul.f32 0.5, %v269
    %v271 = vsub.f32 1.5, %v270
    %v272 = vmul.f32 %v267, %v271
    %vm273 = vweird.f32 %v263
    %vm274 = vweird.f32 %v267
    %vm275 = vmor %vm273, %vm274
    %v276 = vsel %vm275, %v267, %v272
    %v277 = vrsqrt.pop %v264
    %v278 = vmul.f32 %v277, %v264
    %v279 = vmul.f32 %v278, %v277
    %v280 = vmul.f32 0.5, %v279
    %v281 = vsub.f32 1.5, %v280
    %v282 = vmul.f32 %v277, %v281
    %vm283 = vweird.f32 %v264
    %vm284 = vweird.f32 %v277
    %vm285 = vmor %vm283, %vm284
    %v286 = vsel %vm285, %v277, %v282
    %v287 = vrsqrt.pop %v265
    %v288 = vmul.f32 %v287, %v265
    %v289 = vmul.f32 %v288, %v287
    %v290 = vmul.f32 0.5, %v289
    %v291 = vsub.f32 1.5, %v290
    %v292 = vmul.f32 %v287, %v291
    %vm293 = vweird.f32 %v265
    %vm294 = vweird.f32 %v287
    %vm295 = vmor %vm293, %vm294
    %v296 = vsel %vm295, %v287, %v292
    %v297 = vrsqrt.pop %v266
    %v298 = vmul.f32 %v297, %v266
    %v299 = vmul.f32 %v298, %v297
    %v300 = vmul.f32 0.5, %v299
    %v301 = vsub.f32 1.5, %v300
    %v302 = vmul.f32 %v297, %v301
    %vm303 = vweird.f32 %v266
    %vm304 = vweird.f32 %v297
    %vm305 = vmor %vm303, %vm304
    %v306 = vsel %vm305, %v297, %v302
    %v311 = vrot.slane %v286, 7
    %v312 = vrot.slane %v296, 6
    %v313 = vrot.slane %v306, 5
    %vm314 = vcmask 1040384
    %v315 = vsel %vm314, %v276, %v311
    %vm316 = vcmask 1042434
    %v317 = vsel %vm316, %v312, %v313
    %vm318 = vcmask 1041408
    %v319 = vsel %vm318, %v315, %v317
    %v321 = vmul.f32 %v260, %v319
    %v323 = vperm.slane %v321, 0
    %v324 = vperm.slane %v321, 1
    %v325 = vperm.slane %v321, 2
    %v326 = vperm.slane %v321, 3
    %v331 = vmul.f32 %v212, %v323
    %v332 = vmul.f32 %v213, %v324
    %v333 = vmul.f32 %v214, %v325
    %v334 = vmul.f32 %v215, %v326
    %v339 = vrot.slane %v332, 7
    %v340 = vrot.slane %v333, 6
    %v341 = vrot.slane %v334, 5
    %v342 = vsel %vm314, %v331, %v339
    %v343 = vsel %vm316, %v340, %v341
    %v344 = vsel %vm318, %v342, %v343
    %v346 = vsub.f32 %v262, %v344
    %v347 = vmul.f32 %v139, %v323
    %v348 = vmul.f32 %v152, %v324
    %v349 = vmul.f32 %v165, %v325
    %v350 = vmul.f32 %v178, %v326
    %v352 = vperm.slane %v346, 0
    %v353 = vperm.slane %v346, 1
    %v354 = vperm.slane %v346, 2
    %v355 = vperm.slane %v346, 3
    %v360 = vadd.f32 %v347, %v352
    %v361 = vadd.f32 %v348, %v353
    %v362 = vadd.f32 %v349, %v354
    %v363 = vadd.f32 %v350, %v355
    %v364 = vmul.f32 %v360, 0.01
    %v365 = vmul.f32 %v361, 0.01
    %v366 = vmul.f32 %v362, 0.01
    %v367 = vmul.f32 %v363, 0.01
    %v368 = vmax.f32 %v360, %v364
    %v369 = vmax.f32 %v361, %v365
    %v370 = vmax.f32 %v362, %v366
    %v371 = vmax.f32 %v363, %v367
    %v372 = vpack.c.bf16 %v368, %v368
    %v373 = vpack.c.bf16 %v369, %v369
    %v374 = vpack.c.bf16 %v370, %v370
    %v375 = vpack.c.bf16 %v371, %v371
    %v376 = vld [vmem:[#allocation2] sm:$0xff]
    %v377 = vld [vmem:[#allocation2 + $0x8] sm:$0xff]
    %v378 = vld [vmem:[#allocation2 + $0x10] sm:$0xff]
    %v379 = vld [vmem:[#allocation2 + $0x18] sm:$0xff]
    %v380 = vld [vmem:[#allocation2 + $0x20] sm:$0xff]
    %v381 = vld [vmem:[#allocation2 + $0x28] sm:$0xff]
    %v382 = vld [vmem:[#allocation2 + $0x30] sm:$0xff]
    %v383 = vld [vmem:[#allocation2 + $0x38] sm:$0xff]
    %v384 = vld [vmem:[#allocation2 + $0x40] sm:$0xff]
    %v385 = vld [vmem:[#allocation2 + $0x48] sm:$0xff]
    %v386 = vld [vmem:[#allocation2 + $0x50] sm:$0xff]
    %v387 = vld [vmem:[#allocation2 + $0x58] sm:$0xff]
    %v388 = vld [vmem:[#allocation2 + $0x60] sm:$0xff]
    %v389 = vld [vmem:[#allocation2 + $0x68] sm:$0xff]
    %v390 = vld [vmem:[#allocation2 + $0x70] sm:$0xff]
    %v391 = vld [vmem:[#allocation2 + $0x78] sm:$0xff]
    %v392 = vld [vmem:[#allocation2 + $0x80] sm:$0xff]
    %v393 = vld [vmem:[#allocation2 + $0x88] sm:$0xff]
    %v394 = vld [vmem:[#allocation2 + $0x90] sm:$0xff]
    %v395 = vld [vmem:[#allocation2 + $0x98] sm:$0xff]
    %v396 = vld [vmem:[#allocation2 + $0xa0] sm:$0xff]
    %v397 = vld [vmem:[#allocation2 + $0xa8] sm:$0xff]
    %v398 = vld [vmem:[#allocation2 + $0xb0] sm:$0xff]
    %v399 = vld [vmem:[#allocation2 + $0xb8] sm:$0xff]
    %v400 = vld [vmem:[#allocation2 + $0xc0] sm:$0xff]
    %v401 = vld [vmem:[#allocation2 + $0xc8] sm:$0xff]
    %v402 = vld [vmem:[#allocation2 + $0xd0] sm:$0xff]
    %v403 = vld [vmem:[#allocation2 + $0xd8] sm:$0xff]
    %v404 = vld [vmem:[#allocation2 + $0xe0] sm:$0xff]
    %v405 = vld [vmem:[#allocation2 + $0xe8] sm:$0xff]
    %v406 = vld [vmem:[#allocation2 + $0xf0] sm:$0xff]
    %v407 = vld [vmem:[#allocation2 + $0xf8] sm:$0xff]
    %v408 = vld [vmem:[#allocation2 + $0x100] sm:$0xff]
    %v409 = vld [vmem:[#allocation2 + $0x108] sm:$0xff]
    %v410 = vld [vmem:[#allocation2 + $0x110] sm:$0xff]
    %v411 = vld [vmem:[#allocation2 + $0x118] sm:$0xff]
    %v412 = vld [vmem:[#allocation2 + $0x120] sm:$0xff]
    %v413 = vld [vmem:[#allocation2 + $0x128] sm:$0xff]
    %v414 = vld [vmem:[#allocation2 + $0x130] sm:$0xff]
    %v415 = vld [vmem:[#allocation2 + $0x138] sm:$0xff]
    %v416 = vld [vmem:[#allocation2 + $0x140] sm:$0xff]
    %v417 = vld [vmem:[#allocation2 + $0x148] sm:$0xff]
    %v418 = vld [vmem:[#allocation2 + $0x150] sm:$0xff]
    %v419 = vld [vmem:[#allocation2 + $0x158] sm:$0xff]
    %v420 = vld [vmem:[#allocation2 + $0x160] sm:$0xff]
    %v421 = vld [vmem:[#allocation2 + $0x168] sm:$0xff]
    %v422 = vld [vmem:[#allocation2 + $0x170] sm:$0xff]
    %v423 = vld [vmem:[#allocation2 + $0x178] sm:$0xff]
    %v424 = vld [vmem:[#allocation2 + $0x180] sm:$0xff]
    %v425 = vld [vmem:[#allocation2 + $0x188] sm:$0xff]
    %v426 = vld [vmem:[#allocation2 + $0x190] sm:$0xff]
    %v427 = vld [vmem:[#allocation2 + $0x198] sm:$0xff]
    %v428 = vld [vmem:[#allocation2 + $0x1a0] sm:$0xff]
    %v429 = vld [vmem:[#allocation2 + $0x1a8] sm:$0xff]
    %v430 = vld [vmem:[#allocation2 + $0x1b0] sm:$0xff]
    %v431 = vld [vmem:[#allocation2 + $0x1b8] sm:$0xff]
    %v432 = vld [vmem:[#allocation2 + $0x1c0] sm:$0xff]
    %v433 = vld [vmem:[#allocation2 + $0x1c8] sm:$0xff]
    %v434 = vld [vmem:[#allocation2 + $0x1d0] sm:$0xff]
    %v435 = vld [vmem:[#allocation2 + $0x1d8] sm:$0xff]
    %v436 = vld [vmem:[#allocation2 + $0x1e0] sm:$0xff]
    %v437 = vld [vmem:[#allocation2 + $0x1e8] sm:$0xff]
    %v438 = vld [vmem:[#allocation2 + $0x1f0] sm:$0xff]
    %v439 = vld [vmem:[#allocation2 + $0x1f8] sm:$0xff]
    %v504 = vunpack.c.l.b16 %v376
    %v505 = vunpack.c.h.b16 %v376
    %v506 = vunpack.c.l.b16 %v377
    %v507 = vunpack.c.h.b16 %v377
    %v508 = vunpack.c.l.b16 %v378
    %v509 = vunpack.c.h.b16 %v378
    %v510 = vunpack.c.l.b16 %v379
    %v511 = vunpack.c.h.b16 %v379
    %v512 = vunpack.c.l.b16 %v380
    %v513 = vunpack.c.h.b16 %v380
    %v514 = vunpack.c.l.b16 %v381
    %v515 = vunpack.c.h.b16 %v381
    %v516 = vunpack.c.l.b16 %v382
    %v517 = vunpack.c.h.b16 %v382
    %v518 = vunpack.c.l.b16 %v383
    %v519 = vunpack.c.h.b16 %v383
    %v520 = vunpack.c.l.b16 %v384
    %v521 = vunpack.c.h.b16 %v384
    %v522 = vunpack.c.l.b16 %v385
    %v523 = vunpack.c.h.b16 %v385
    %v524 = vunpack.c.l.b16 %v386
    %v525 = vunpack.c.h.b16 %v386
    %v526 = vunpack.c.l.b16 %v387
    %v527 = vunpack.c.h.b16 %v387
    %v528 = vunpack.c.l.b16 %v388
    %v529 = vunpack.c.h.b16 %v388
    %v530 = vunpack.c.l.b16 %v389
    %v531 = vunpack.c.h.b16 %v389
    %v532 = vunpack.c.l.b16 %v390
    %v533 = vunpack.c.h.b16 %v390
    %v534 = vunpack.c.l.b16 %v391
    %v535 = vunpack.c.h.b16 %v391
    %v536 = vunpack.c.l.b16 %v392
    %v537 = vunpack.c.h.b16 %v392
    %v538 = vunpack.c.l.b16 %v393
    %v539 = vunpack.c.h.b16 %v393
    %v540 = vunpack.c.l.b16 %v394
    %v541 = vunpack.c.h.b16 %v394
    %v542 = vunpack.c.l.b16 %v395
    %v543 = vunpack.c.h.b16 %v395
    %v544 = vunpack.c.l.b16 %v396
    %v545 = vunpack.c.h.b16 %v396
    %v546 = vunpack.c.l.b16 %v397
    %v547 = vunpack.c.h.b16 %v397
    %v548 = vunpack.c.l.b16 %v398
    %v549 = vunpack.c.h.b16 %v398
    %v550 = vunpack.c.l.b16 %v399
    %v551 = vunpack.c.h.b16 %v399
    %v552 = vunpack.c.l.b16 %v400
    %v553 = vunpack.c.h.b16 %v400
    %v554 = vunpack.c.l.b16 %v401
    %v555 = vunpack.c.h.b16 %v401
    %v556 = vunpack.c.l.b16 %v402
    %v557 = vunpack.c.h.b16 %v402
    %v558 = vunpack.c.l.b16 %v403
    %v559 = vunpack.c.h.b16 %v403
    %v560 = vunpack.c.l.b16 %v404
    %v561 = vunpack.c.h.b16 %v404
    %v562 = vunpack.c.l.b16 %v405
    %v563 = vunpack.c.h.b16 %v405
    %v564 = vunpack.c.l.b16 %v406
    %v565 = vunpack.c.h.b16 %v406
    %v566 = vunpack.c.l.b16 %v407
    %v567 = vunpack.c.h.b16 %v407
    %v568 = vunpack.c.l.b16 %v408
    %v569 = vunpack.c.h.b16 %v408
    %v570 = vunpack.c.l.b16 %v409
    %v571 = vunpack.c.h.b16 %v409
    %v572 = vunpack.c.l.b16 %v410
    %v573 = vunpack.c.h.b16 %v410
    %v574 = vunpack.c.l.b16 %v411
    %v575 = vunpack.c.h.b16 %v411
    %v576 = vunpack.c.l.b16 %v412
    %v577 = vunpack.c.h.b16 %v412
    %v578 = vunpack.c.l.b16 %v413
    %v579 = vunpack.c.h.b16 %v413
    %v580 = vunpack.c.l.b16 %v414
    %v581 = vunpack.c.h.b16 %v414
    %v582 = vunpack.c.l.b16 %v415
    %v583 = vunpack.c.h.b16 %v415
    %v584 = vunpack.c.l.b16 %v416
    %v585 = vunpack.c.h.b16 %v416
    %v586 = vunpack.c.l.b16 %v417
    %v587 = vunpack.c.h.b16 %v417
    %v588 = vunpack.c.l.b16 %v418
    %v589 = vunpack.c.h.b16 %v418
    %v590 = vunpack.c.l.b16 %v419
    %v591 = vunpack.c.h.b16 %v419
    %v592 = vunpack.c.l.b16 %v420
    %v593 = vunpack.c.h.b16 %v420
    %v594 = vunpack.c.l.b16 %v421
    %v595 = vunpack.c.h.b16 %v421
    %v596 = vunpack.c.l.b16 %v422
    %v597 = vunpack.c.h.b16 %v422
    %v598 = vunpack.c.l.b16 %v423
    %v599 = vunpack.c.h.b16 %v423
    %v600 = vunpack.c.l.b16 %v424
    %v601 = vunpack.c.h.b16 %v424
    %v602 = vunpack.c.l.b16 %v425
    %v603 = vunpack.c.h.b16 %v425
    %v604 = vunpack.c.l.b16 %v426
    %v605 = vunpack.c.h.b16 %v426
    %v606 = vunpack.c.l.b16 %v427
    %v607 = vunpack.c.h.b16 %v427
    %v608 = vunpack.c.l.b16 %v428
    %v609 = vunpack.c.h.b16 %v428
    %v610 = vunpack.c.l.b16 %v429
    %v611 = vunpack.c.h.b16 %v429
    %v612 = vunpack.c.l.b16 %v430
    %v613 = vunpack.c.h.b16 %v430
    %v614 = vunpack.c.l.b16 %v431
    %v615 = vunpack.c.h.b16 %v431
    %v616 = vunpack.c.l.b16 %v432
    %v617 = vunpack.c.h.b16 %v432
    %v618 = vunpack.c.l.b16 %v433
    %v619 = vunpack.c.h.b16 %v433
    %v620 = vunpack.c.l.b16 %v434
    %v621 = vunpack.c.h.b16 %v434
    %v622 = vunpack.c.l.b16 %v435
    %v623 = vunpack.c.h.b16 %v435
    %v624 = vunpack.c.l.b16 %v436
    %v625 = vunpack.c.h.b16 %v436
    %v626 = vunpack.c.l.b16 %v437
    %v627 = vunpack.c.h.b16 %v437
    %v628 = vunpack.c.l.b16 %v438
    %v629 = vunpack.c.h.b16 %v438
    %v630 = vunpack.c.l.b16 %v439
    %v631 = vunpack.c.h.b16 %v439
    %v632 = vpack.c.b16 %v506, %v504
    %v633 = vpack.c.b16 %v507, %v505
    %v634 = vpack.c.b16 %v510, %v508
    %v635 = vpack.c.b16 %v511, %v509
    %v636 = vpack.c.b16 %v514, %v512
    %v637 = vpack.c.b16 %v515, %v513
    %v638 = vpack.c.b16 %v518, %v516
    %v639 = vpack.c.b16 %v519, %v517
    %v640 = vpack.c.b16 %v522, %v520
    %v641 = vpack.c.b16 %v523, %v521
    %v642 = vpack.c.b16 %v526, %v524
    %v643 = vpack.c.b16 %v527, %v525
    %v644 = vpack.c.b16 %v530, %v528
    %v645 = vpack.c.b16 %v531, %v529
    %v646 = vpack.c.b16 %v534, %v532
    %v647 = vpack.c.b16 %v535, %v533
    %v648 = vpack.c.b16 %v538, %v536
    %v649 = vpack.c.b16 %v539, %v537
    %v650 = vpack.c.b16 %v542, %v540
    %v651 = vpack.c.b16 %v543, %v541
    %v652 = vpack.c.b16 %v546, %v544
    %v653 = vpack.c.b16 %v547, %v545
    %v654 = vpack.c.b16 %v550, %v548
    %v655 = vpack.c.b16 %v551, %v549
    %v656 = vpack.c.b16 %v554, %v552
    %v657 = vpack.c.b16 %v555, %v553
    %v658 = vpack.c.b16 %v558, %v556
    %v659 = vpack.c.b16 %v559, %v557
    %v660 = vpack.c.b16 %v562, %v560
    %v661 = vpack.c.b16 %v563, %v561
    %v662 = vpack.c.b16 %v566, %v564
    %v663 = vpack.c.b16 %v567, %v565
    %v664 = vpack.c.b16 %v570, %v568
    %v665 = vpack.c.b16 %v571, %v569
    %v666 = vpack.c.b16 %v574, %v572
    %v667 = vpack.c.b16 %v575, %v573
    %v668 = vpack.c.b16 %v578, %v576
    %v669 = vpack.c.b16 %v579, %v577
    %v670 = vpack.c.b16 %v582, %v580
    %v671 = vpack.c.b16 %v583, %v581
    %v672 = vpack.c.b16 %v586, %v584
    %v673 = vpack.c.b16 %v587, %v585
    %v674 = vpack.c.b16 %v590, %v588
    %v675 = vpack.c.b16 %v591, %v589
    %v676 = vpack.c.b16 %v594, %v592
    %v677 = vpack.c.b16 %v595, %v593
    %v678 = vpack.c.b16 %v598, %v596
    %v679 = vpack.c.b16 %v599, %v597
    %v680 = vpack.c.b16 %v602, %v600
    %v681 = vpack.c.b16 %v603, %v601
    %v682 = vpack.c.b16 %v606, %v604
    %v683 = vpack.c.b16 %v607, %v605
    %v684 = vpack.c.b16 %v610, %v608
    %v685 = vpack.c.b16 %v611, %v609
    %v686 = vpack.c.b16 %v614, %v612
    %v687 = vpack.c.b16 %v615, %v613
    %v688 = vpack.c.b16 %v618, %v616
    %v689 = vpack.c.b16 %v619, %v617
    %v690 = vpack.c.b16 %v622, %v620
    %v691 = vpack.c.b16 %v623, %v621
    %v692 = vpack.c.b16 %v626, %v624
    %v693 = vpack.c.b16 %v627, %v625
    %v694 = vpack.c.b16 %v630, %v628
    %v695 = vpack.c.b16 %v631, %v629
    %760 = vmatpush.bf16.msra.mxu0 %v646
    %761 = vmatpush.bf16.msra.mxu0 %v644
    %762 = vmatpush.bf16.msra.mxu0 %v642
    %763 = vmatpush.bf16.msra.mxu0 %v640
    %764 = vmatpush.bf16.msra.mxu0 %v638
    %765 = vmatpush.bf16.msra.mxu0 %v636
    %766 = vmatpush.bf16.msra.mxu0 %v634
    %767 = vmatpush.bf16.msra.mxu0 %v632
    %768 = vmatmul.bf16.gmra.mxu0 %v372
    %v769 = vpop.f32.mrf.mxu0
    %v770 = vadd.f32 0.0, %v769
    %v771 = vpop.f32.mrf.mxu0
    %772 = vdwg.mxu0
    %773 = vmatpush.bf16.msra.mxu0 %v662
    %774 = vmatpush.bf16.msra.mxu0 %v660
    %775 = vmatpush.bf16.msra.mxu0 %v658
    %776 = vmatpush.bf16.msra.mxu0 %v656
    %777 = vmatpush.bf16.msra.mxu0 %v654
    %778 = vmatpush.bf16.msra.mxu0 %v652
    %779 = vmatpush.bf16.msra.mxu0 %v650
    %780 = vmatpush.bf16.msra.mxu0 %v648
    %781 = vmatmul.bf16.gmra.mxu0 %v373
    %v782 = vpop.f32.mrf.mxu0
    %v783 = vadd.f32 %v770, %v782
    %v784 = vpop.f32.mrf.mxu0
    %785 = vdwg.mxu0
    %786 = vmatpush.bf16.msra.mxu0 %v678
    %787 = vmatpush.bf16.msra.mxu0 %v676
    %788 = vmatpush.bf16.msra.mxu0 %v674
    %789 = vmatpush.bf16.msra.mxu0 %v672
    %790 = vmatpush.bf16.msra.mxu0 %v670
    %791 = vmatpush.bf16.msra.mxu0 %v668
    %792 = vmatpush.bf16.msra.mxu0 %v666
    %793 = vmatpush.bf16.msra.mxu0 %v664
    %794 = vmatmul.bf16.gmra.mxu0 %v374
    %v795 = vpop.f32.mrf.mxu0
    %v796 = vadd.f32 %v783, %v795
    %v797 = vpop.f32.mrf.mxu0
    %798 = vdwg.mxu0
    %799 = vmatpush.bf16.msra.mxu0 %v694
    %800 = vmatpush.bf16.msra.mxu0 %v692
    %801 = vmatpush.bf16.msra.mxu0 %v690
    %802 = vmatpush.bf16.msra.mxu0 %v688
    %803 = vmatpush.bf16.msra.mxu0 %v686
    %804 = vmatpush.bf16.msra.mxu0 %v684
    %805 = vmatpush.bf16.msra.mxu0 %v682
    %806 = vmatpush.bf16.msra.mxu0 %v680
    %807 = vmatmul.bf16.gmra.mxu0 %v375
    %v808 = vpop.f32.mrf.mxu0
    %v809 = vadd.f32 %v796, %v808
    %v810 = vpop.f32.mrf.mxu0
    %811 = vdwg.mxu0
    %812 = vmatpush.bf16.msra.mxu0 %v647
    %813 = vmatpush.bf16.msra.mxu0 %v645
    %814 = vmatpush.bf16.msra.mxu0 %v643
    %815 = vmatpush.bf16.msra.mxu0 %v641
    %816 = vmatpush.bf16.msra.mxu0 %v639
    %817 = vmatpush.bf16.msra.mxu0 %v637
    %818 = vmatpush.bf16.msra.mxu0 %v635
    %819 = vmatpush.bf16.msra.mxu0 %v633
    %820 = vmatmul.bf16.gmra.mxu0 %v372
    %v821 = vpop.f32.mrf.mxu0
    %v822 = vadd.f32 0.0, %v821
    %v823 = vpop.f32.mrf.mxu0
    %824 = vdwg.mxu0
    %825 = vmatpush.bf16.msra.mxu0 %v663
    %826 = vmatpush.bf16.msra.mxu0 %v661
    %827 = vmatpush.bf16.msra.mxu0 %v659
    %828 = vmatpush.bf16.msra.mxu0 %v657
    %829 = vmatpush.bf16.msra.mxu0 %v655
    %830 = vmatpush.bf16.msra.mxu0 %v653
    %831 = vmatpush.bf16.msra.mxu0 %v651
    %832 = vmatpush.bf16.msra.mxu0 %v649
    %833 = vmatmul.bf16.gmra.mxu0 %v373
    %v834 = vpop.f32.mrf.mxu0
    %v835 = vadd.f32 %v822, %v834
    %v836 = vpop.f32.mrf.mxu0
    %837 = vdwg.mxu0
    %838 = vmatpush.bf16.msra.mxu0 %v679
    %839 = vmatpush.bf16.msra.mxu0 %v677
    %840 = vmatpush.bf16.msra.mxu0 %v675
    %841 = vmatpush.bf16.msra.mxu0 %v673
    %842 = vmatpush.bf16.msra.mxu0 %v671
    %843 = vmatpush.bf16.msra.mxu0 %v669
    %844 = vmatpush.bf16.msra.mxu0 %v667
    %845 = vmatpush.bf16.msra.mxu0 %v665
    %846 = vmatmul.bf16.gmra.mxu0 %v374
    %v847 = vpop.f32.mrf.mxu0
    %v848 = vadd.f32 %v835, %v847
    %v849 = vpop.f32.mrf.mxu0
    %850 = vdwg.mxu0
    %851 = vmatpush.bf16.msra.mxu0 %v695
    %852 = vmatpush.bf16.msra.mxu0 %v693
    %853 = vmatpush.bf16.msra.mxu0 %v691
    %854 = vmatpush.bf16.msra.mxu0 %v689
    %855 = vmatpush.bf16.msra.mxu0 %v687
    %856 = vmatpush.bf16.msra.mxu0 %v685
    %857 = vmatpush.bf16.msra.mxu0 %v683
    %858 = vmatpush.bf16.msra.mxu0 %v681
    %859 = vmatmul.bf16.gmra.mxu0 %v375
    %v860 = vpop.f32.mrf.mxu0
    %v861 = vadd.f32 %v848, %v860
    %v862 = vpop.f32.mrf.mxu0
    %863 = vdwg.mxu0
    %v864 = vrot.slane %v809, 4
    %v865 = vadd.f32 %v809, %v864
    %v866 = vrot.slane %v865, 2
    %v867 = vadd.f32 %v865, %v866
    %v868 = vrot.slane %v867, 1
    %v869 = vadd.f32 %v867, %v868
    %v870 = vrot.slane %v861, 4
    %v871 = vadd.f32 %v861, %v870
    %v872 = vrot.slane %v871, 2
    %v873 = vadd.f32 %v871, %v872
    %v874 = vrot.slane %v873, 1
    %v875 = vadd.f32 %v873, %v874
    %v876 = vmul.f32 %v869, %v211
    %v877 = vmul.f32 %v875, %v211
    %v878 = vmul.f32 %v809, %v809
    %v879 = vmul.f32 %v861, %v861
    %v880 = vrot.slane %v878, 4
    %v881 = vadd.f32 %v878, %v880
    %v882 = vrot.slane %v881, 2
    %v883 = vadd.f32 %v881, %v882
    %v884 = vrot.slane %v883, 1
    %v885 = vadd.f32 %v883, %v884
    %v886 = vrot.slane %v879, 4
    %v887 = vadd.f32 %v879, %v886
    %v888 = vrot.slane %v887, 2
    %v889 = vadd.f32 %v887, %v888
    %v890 = vrot.slane %v889, 1
    %v891 = vadd.f32 %v889, %v890
    %v892 = vmul.f32 %v885, %v211
    %v893 = vmul.f32 %v891, %v211
    %v894 = vmul.f32 %v876, %v876
    %v895 = vmul.f32 %v877, %v877
    %v896 = vsub.f32 %v892, %v894
    %v897 = vsub.f32 %v893, %v895
    %v898 = vmax.f32 %v896, 0.0
    %v899 = vmax.f32 %v897, 0.0
    %s900 = scalar_lea.vmem [#allocation7], 2
    %v901 = vld [vmem:[%s900] ss:$8 sm:$0x3]
    %s902 = scalar_lea.vmem [#allocation7], 3
    %v903 = vld [vmem:[%s902] ss:$8 sm:$0x3]
    %v904 = vadd.f32 %v898, 1e-05
    %v905 = vadd.f32 %v899, 1e-05
    %v906 = vrsqrt.pop %v904
    %v907 = vmul.f32 %v906, %v904
    %v908 = vmul.f32 %v907, %v906
    %v909 = vmul.f32 0.5, %v908
    %v910 = vsub.f32 1.5, %v909
    %v911 = vmul.f32 %v906, %v910
    %vm912 = vweird.f32 %v904
    %vm913 = vweird.f32 %v906
    %vm914 = vmor %vm912, %vm913
    %v915 = vsel %vm914, %v906, %v911
    %v916 = vrsqrt.pop %v905
    %v917 = vmul.f32 %v916, %v905
    %v918 = vmul.f32 %v917, %v916
    %v919 = vmul.f32 0.5, %v918
    %v920 = vsub.f32 1.5, %v919
    %v921 = vmul.f32 %v916, %v920
    %vm922 = vweird.f32 %v905
    %vm923 = vweird.f32 %v916
    %vm924 = vmor %vm922, %vm923
    %v925 = vsel %vm924, %v916, %v921
    %v928 = vrot.slane %v925, 7
    %v929 = vsel %vm314, %v915, %v928
    %v931 = vmul.f32 %v901, %v929
    %v933 = vperm.slane %v931, 0
    %v934 = vperm.slane %v931, 1
    %v937 = vmul.f32 %v876, %v933
    %v938 = vmul.f32 %v877, %v934
    %v941 = vrot.slane %v938, 7
    %v942 = vsel %vm314, %v937, %v941
    %v944 = vsub.f32 %v903, %v942
    %v945 = vmul.f32 %v809, %v933
    %v946 = vmul.f32 %v861, %v934
    %v948 = vperm.slane %v944, 0
    %v949 = vperm.slane %v944, 1
    %v952 = vadd.f32 %v945, %v948
    %v953 = vadd.f32 %v946, %v949
    %v954 = vmul.f32 %v952, 0.01
    %v955 = vmul.f32 %v953, 0.01
    %v956 = vmax.f32 %v952, %v954
    %v957 = vmax.f32 %v953, %v955
    %v958 = vpack.c.bf16 %v956, %v956
    %v959 = vpack.c.bf16 %v957, %v957
    %v960 = vld [vmem:[#allocation5] sm:$0xf]
    %v961 = vld [vmem:[#allocation5 + $0x4] sm:$0xf]
    %v962 = vld [vmem:[#allocation5 + $0x8] sm:$0xf]
    %v963 = vld [vmem:[#allocation5 + $0xc] sm:$0xf]
    %v964 = vld [vmem:[#allocation5 + $0x10] sm:$0xf]
    %v965 = vld [vmem:[#allocation5 + $0x14] sm:$0xf]
    %v966 = vld [vmem:[#allocation5 + $0x18] sm:$0xf]
    %v967 = vld [vmem:[#allocation5 + $0x1c] sm:$0xf]
    %v968 = vld [vmem:[#allocation5 + $0x20] sm:$0xf]
    %v969 = vld [vmem:[#allocation5 + $0x24] sm:$0xf]
    %v970 = vld [vmem:[#allocation5 + $0x28] sm:$0xf]
    %v971 = vld [vmem:[#allocation5 + $0x2c] sm:$0xf]
    %v972 = vld [vmem:[#allocation5 + $0x30] sm:$0xf]
    %v973 = vld [vmem:[#allocation5 + $0x34] sm:$0xf]
    %v974 = vld [vmem:[#allocation5 + $0x38] sm:$0xf]
    %v975 = vld [vmem:[#allocation5 + $0x3c] sm:$0xf]
    %v976 = vld [vmem:[#allocation5 + $0x40] sm:$0xf]
    %v977 = vld [vmem:[#allocation5 + $0x44] sm:$0xf]
    %v978 = vld [vmem:[#allocation5 + $0x48] sm:$0xf]
    %v979 = vld [vmem:[#allocation5 + $0x4c] sm:$0xf]
    %v980 = vld [vmem:[#allocation5 + $0x50] sm:$0xf]
    %v981 = vld [vmem:[#allocation5 + $0x54] sm:$0xf]
    %v982 = vld [vmem:[#allocation5 + $0x58] sm:$0xf]
    %v983 = vld [vmem:[#allocation5 + $0x5c] sm:$0xf]
    %v984 = vld [vmem:[#allocation5 + $0x60] sm:$0xf]
    %v985 = vld [vmem:[#allocation5 + $0x64] sm:$0xf]
    %v986 = vld [vmem:[#allocation5 + $0x68] sm:$0xf]
    %v987 = vld [vmem:[#allocation5 + $0x6c] sm:$0xf]
    %v988 = vld [vmem:[#allocation5 + $0x70] sm:$0xf]
    %v989 = vld [vmem:[#allocation5 + $0x74] sm:$0xf]
    %v990 = vld [vmem:[#allocation5 + $0x78] sm:$0xf]
    %v991 = vld [vmem:[#allocation5 + $0x7c] sm:$0xf]
    %v1024 = vunpack.c.l.b16 %v960
    %v1025 = vunpack.c.l.b16 %v961
    %v1026 = vunpack.c.l.b16 %v962
    %v1027 = vunpack.c.l.b16 %v963
    %v1028 = vunpack.c.l.b16 %v964
    %v1029 = vunpack.c.l.b16 %v965
    %v1030 = vunpack.c.l.b16 %v966
    %v1031 = vunpack.c.l.b16 %v967
    %v1032 = vunpack.c.l.b16 %v968
    %v1033 = vunpack.c.l.b16 %v969
    %v1034 = vunpack.c.l.b16 %v970
    %v1035 = vunpack.c.l.b16 %v971
    %v1036 = vunpack.c.l.b16 %v972
    %v1037 = vunpack.c.l.b16 %v973
    %v1038 = vunpack.c.l.b16 %v974
    %v1039 = vunpack.c.l.b16 %v975
    %v1040 = vunpack.c.l.b16 %v976
    %v1041 = vunpack.c.l.b16 %v977
    %v1042 = vunpack.c.l.b16 %v978
    %v1043 = vunpack.c.l.b16 %v979
    %v1044 = vunpack.c.l.b16 %v980
    %v1045 = vunpack.c.l.b16 %v981
    %v1046 = vunpack.c.l.b16 %v982
    %v1047 = vunpack.c.l.b16 %v983
    %v1048 = vunpack.c.l.b16 %v984
    %v1049 = vunpack.c.l.b16 %v985
    %v1050 = vunpack.c.l.b16 %v986
    %v1051 = vunpack.c.l.b16 %v987
    %v1052 = vunpack.c.l.b16 %v988
    %v1053 = vunpack.c.l.b16 %v989
    %v1054 = vunpack.c.l.b16 %v990
    %v1055 = vunpack.c.l.b16 %v991
    %v1056 = vpack.c.b16 %v1025, %v1024
    %v1057 = vpack.c.b16 %v1027, %v1026
    %v1058 = vpack.c.b16 %v1029, %v1028
    %v1059 = vpack.c.b16 %v1031, %v1030
    %v1060 = vpack.c.b16 %v1033, %v1032
    %v1061 = vpack.c.b16 %v1035, %v1034
    %v1062 = vpack.c.b16 %v1037, %v1036
    %v1063 = vpack.c.b16 %v1039, %v1038
    %v1064 = vpack.c.b16 %v1041, %v1040
    %v1065 = vpack.c.b16 %v1043, %v1042
    %v1066 = vpack.c.b16 %v1045, %v1044
    %v1067 = vpack.c.b16 %v1047, %v1046
    %v1068 = vpack.c.b16 %v1049, %v1048
    %v1069 = vpack.c.b16 %v1051, %v1050
    %v1070 = vpack.c.b16 %v1053, %v1052
    %v1071 = vpack.c.b16 %v1055, %v1054
    %1088 = vmatpush.bf16.msra.mxu0 %v1063
    %1089 = vmatpush.bf16.msra.mxu0 %v1062
    %1090 = vmatpush.bf16.msra.mxu0 %v1061
    %1091 = vmatpush.bf16.msra.mxu0 %v1060
    %1092 = vmatpush.bf16.msra.mxu0 %v1059
    %1093 = vmatpush.bf16.msra.mxu0 %v1058
    %1094 = vmatpush.bf16.msra.mxu0 %v1057
    %1095 = vmatpush.bf16.msra.mxu0 %v1056
    %1096 = vmatmul.bf16.gmra.mxu0 %v958
    %v1097 = vpop.f32.mrf.mxu0
    %v1098 = vadd.f32 0.0, %v1097
    %v1099 = vpop.f32.mrf.mxu0
    %1100 = vdwg.mxu0
    %1101 = vmatpush.bf16.msra.mxu0 %v1071
    %1102 = vmatpush.bf16.msra.mxu0 %v1070
    %1103 = vmatpush.bf16.msra.mxu0 %v1069
    %1104 = vmatpush.bf16.msra.mxu0 %v1068
    %1105 = vmatpush.bf16.msra.mxu0 %v1067
    %1106 = vmatpush.bf16.msra.mxu0 %v1066
    %1107 = vmatpush.bf16.msra.mxu0 %v1065
    %1108 = vmatpush.bf16.msra.mxu0 %v1064
    %1109 = vmatmul.bf16.gmra.mxu0 %v959
    %v1110 = vpop.f32.mrf.mxu0
    %v1111 = vadd.f32 %v1098, %v1110
    %v1112 = vpop.f32.mrf.mxu0
    %1113 = vdwg.mxu0
    %v1114 = vrot.slane %v1111, 4
    %v1115 = vadd.f32 %v1111, %v1114
    %v1116 = vrot.slane %v1115, 2
    %v1117 = vadd.f32 %v1115, %v1116
    %v1118 = vrot.slane %v1117, 1
    %v1119 = vadd.f32 %v1117, %v1118
    %v1120 = vmul.f32 %v1119, %v211
    %v1121 = vmul.f32 %v1111, %v1111
    %v1122 = vrot.slane %v1121, 4
    %v1123 = vadd.f32 %v1121, %v1122
    %v1124 = vrot.slane %v1123, 2
    %v1125 = vadd.f32 %v1123, %v1124
    %v1126 = vrot.slane %v1125, 1
    %v1127 = vadd.f32 %v1125, %v1126
    %v1128 = vmul.f32 %v1127, %v211
    %v1129 = vmul.f32 %v1120, %v1120
    %v1130 = vsub.f32 %v1128, %v1129
    %v1131 = vmax.f32 %v1130, 0.0
    %v1132 = vld [vmem:[#allocation7 + $0x4] ss:$0 sm:$0xff]
    %v1133 = vld [vmem:[#allocation7 + $0x5] ss:$0 sm:$0xff]
    %v1134 = vadd.f32 %v1131, 1e-05
    %v1135 = vrsqrt.pop %v1134
    %v1136 = vmul.f32 %v1135, %v1134
    %v1137 = vmul.f32 %v1136, %v1135
    %v1138 = vmul.f32 0.5, %v1137
    %v1139 = vsub.f32 1.5, %v1138
    %v1140 = vmul.f32 %v1135, %v1139
    %vm1141 = vweird.f32 %v1134
    %vm1142 = vweird.f32 %v1135
    %vm1143 = vmor %vm1141, %vm1142
    %v1144 = vsel %vm1143, %v1135, %v1140
    %v1145 = vmul.f32 %v1132, %v1144
    %v1146 = vmul.f32 %v1120, %v1145
    %v1147 = vsub.f32 %v1133, %v1146
    %v1148 = vmul.f32 %v1111, %v1145
    %v1149 = vadd.f32 %v1148, %v1147
    %v1150 = vmul.f32 %v1149, 0.01
    %v1151 = vmax.f32 %v1149, %v1150
    %v1152 = vpack.c.bf16 %v1151, %v1151
    %v1153 = vld [vmem:[%s4] sm:$0xf]
    %v1154 = vld [vmem:[%s4 + $0x4] sm:$0xf]
    %v1155 = vld [vmem:[%s4 + $0x8] sm:$0xf]
    %v1156 = vld [vmem:[%s4 + $0xc] sm:$0xf]
    %v1157 = vld [vmem:[%s4 + $0x10] sm:$0xf]
    %v1158 = vld [vmem:[%s4 + $0x14] sm:$0xf]
    %v1159 = vld [vmem:[%s4 + $0x18] sm:$0xf]
    %v1160 = vld [vmem:[%s4 + $0x1c] sm:$0xf]
    %v1161 = vld [vmem:[%s4 + $0x20] sm:$0xf]
    %v1162 = vld [vmem:[%s4 + $0x24] sm:$0xf]
    %v1163 = vld [vmem:[%s4 + $0x28] sm:$0xf]
    %v1164 = vld [vmem:[%s4 + $0x2c] sm:$0xf]
    %v1165 = vld [vmem:[%s4 + $0x30] sm:$0xf]
    %v1166 = vld [vmem:[%s4 + $0x34] sm:$0xf]
    %v1167 = vld [vmem:[%s4 + $0x38] sm:$0xf]
    %v1168 = vld [vmem:[%s4 + $0x3c] sm:$0xf]
    %v1185 = vunpack.c.l.b16 %v1153
    %v1186 = vunpack.c.l.b16 %v1154
    %v1187 = vunpack.c.l.b16 %v1155
    %v1188 = vunpack.c.l.b16 %v1156
    %v1189 = vunpack.c.l.b16 %v1157
    %v1190 = vunpack.c.l.b16 %v1158
    %v1191 = vunpack.c.l.b16 %v1159
    %v1192 = vunpack.c.l.b16 %v1160
    %v1193 = vunpack.c.l.b16 %v1161
    %v1194 = vunpack.c.l.b16 %v1162
    %v1195 = vunpack.c.l.b16 %v1163
    %v1196 = vunpack.c.l.b16 %v1164
    %v1197 = vunpack.c.l.b16 %v1165
    %v1198 = vunpack.c.l.b16 %v1166
    %v1199 = vunpack.c.l.b16 %v1167
    %v1200 = vunpack.c.l.b16 %v1168
    %v1201 = vpack.c.b16 %v1186, %v1185
    %v1202 = vpack.c.b16 %v1188, %v1187
    %v1203 = vpack.c.b16 %v1190, %v1189
    %v1204 = vpack.c.b16 %v1192, %v1191
    %v1205 = vpack.c.b16 %v1194, %v1193
    %v1206 = vpack.c.b16 %v1196, %v1195
    %v1207 = vpack.c.b16 %v1198, %v1197
    %v1208 = vpack.c.b16 %v1200, %v1199
    %1217 = vmatpush.bf16.msra.mxu0 %v1208
    %1218 = vmatpush.bf16.msra.mxu0 %v1207
    %1219 = vmatpush.bf16.msra.mxu0 %v1206
    %1220 = vmatpush.bf16.msra.mxu0 %v1205
    %1221 = vmatpush.bf16.msra.mxu0 %v1204
    %1222 = vmatpush.bf16.msra.mxu0 %v1203
    %1223 = vmatpush.bf16.msra.mxu0 %v1202
    %1224 = vmatpush.bf16.msra.mxu0 %v1201
    %1225 = vmatmul.bf16.gmra.mxu0 %v1152
    %v1226 = vpop.f32.mrf.mxu0
    %v1227 = vadd.f32 0.0, %v1226
    %v1228 = vpop.f32.mrf.mxu0
    %1229 = vdwg.mxu0
    %vm1230 = vcmask 523264
    %v1231 = vsel %vm1230, %v1227, 0.0
    %v1232 = vrot.slane %v1231, 4
    %v1233 = vadd.f32 %v1231, %v1232
    %v1234 = vrot.slane %v1233, 2
    %v1235 = vadd.f32 %v1233, %v1234
    %v1236 = vrot.slane %v1235, 1
    %v1237 = vadd.f32 %v1235, %v1236
    %v1238 = vmul.f32 %v1237, %v211
    %v1239 = vmul.f32 %v1227, %v1227
    %v1240 = vsel %vm1230, %v1239, 0.0
    %v1241 = vrot.slane %v1240, 4
    %v1242 = vadd.f32 %v1240, %v1241
    %v1243 = vrot.slane %v1242, 2
    %v1244 = vadd.f32 %v1242, %v1243
    %v1245 = vrot.slane %v1244, 1
    %v1246 = vadd.f32 %v1244, %v1245
    %v1247 = vmul.f32 %v1246, %v211
    %v1248 = vmul.f32 %v1238, %v1238
    %v1249 = vsub.f32 %v1247, %v1248
    %v1250 = vmax.f32 %v1249, 0.0
    %v1251 = vld [vmem:[#allocation7 + $0x6] ss:$0 sm:$0xff]
    %v1252 = vld [vmem:[#allocation7 + $0x7] ss:$0 sm:$0xff]
    %v1253 = vadd.f32 %v1250, 1e-05
    %v1254 = vrsqrt.pop %v1253
    %v1255 = vmul.f32 %v1254, %v1253
    %v1256 = vmul.f32 %v1255, %v1254
    %v1257 = vmul.f32 0.5, %v1256
    %v1258 = vsub.f32 1.5, %v1257
    %v1259 = vmul.f32 %v1254, %v1258
    %vm1260 = vweird.f32 %v1253
    %vm1261 = vweird.f32 %v1254
    %vm1262 = vmor %vm1260, %vm1261
    %v1263 = vsel %vm1262, %v1254, %v1259
    %v1264 = vmul.f32 %v1251, %v1263
    %v1265 = vmul.f32 %v1238, %v1264
    %v1266 = vsub.f32 %v1252, %v1265
    %v1267 = vmul.f32 %v1227, %v1264
    %v1268 = vadd.f32 %v1267, %v1266
    %v1269 = vmul.f32 %v1268, 0.01
    %v1270 = vmax.f32 %v1268, %v1269
    %v1271 = vld [vmem:[#allocation7 + $0x20] ss:$0 sm:$0xff]
    %v1272 = vpack.c.bf16 %v1270, %v1270
    %v1273 = vld [vmem:[%s5] sm:$0xf]
    %v1274 = vld [vmem:[%s5 + $0x4] sm:$0xf]
    %v1275 = vld [vmem:[%s5 + $0x8] sm:$0xf]
    %v1276 = vld [vmem:[%s5 + $0xc] sm:$0xf]
    %v1277 = vld [vmem:[%s5 + $0x10] sm:$0xf]
    %v1278 = vld [vmem:[%s5 + $0x14] sm:$0xf]
    %v1279 = vld [vmem:[%s5 + $0x18] sm:$0xf]
    %v1280 = vld [vmem:[%s5 + $0x1c] sm:$0xf]
    %v1289 = vunpack.c.l.b16 %v1273
    %v1290 = vunpack.c.l.b16 %v1274
    %v1291 = vunpack.c.l.b16 %v1275
    %v1292 = vunpack.c.l.b16 %v1276
    %v1293 = vunpack.c.l.b16 %v1277
    %v1294 = vunpack.c.l.b16 %v1278
    %v1295 = vunpack.c.l.b16 %v1279
    %v1296 = vunpack.c.l.b16 %v1280
    %v1297 = vpack.c.b16 %v1290, %v1289
    %v1298 = vpack.c.b16 %v1292, %v1291
    %v1299 = vpack.c.b16 %v1294, %v1293
    %v1300 = vpack.c.b16 %v1296, %v1295
    %v1306 = vsel %vm1230, %v1272, 0
    %1308 = vmatpush.bf16.msra.mxu0 0
    %1309 = vmatpush.bf16.msra.mxu0 0
    %1310 = vmatpush.bf16.msra.mxu0 0
    %1311 = vmatpush.bf16.msra.mxu0 0
    %1312 = vmatpush.bf16.msra.mxu0 %v1300
    %1313 = vmatpush.bf16.msra.mxu0 %v1299
    %1314 = vmatpush.bf16.msra.mxu0 %v1298
    %1315 = vmatpush.bf16.msra.mxu0 %v1297
    %1316 = vmatmul.bf16.gmra.mxu0 %v1306
    %v1317 = vpop.f32.mrf.mxu0
    %v1318 = vadd.f32 %v1271, %v1317
    %v1319 = vpop.f32.mrf.mxu0
    %1320 = vdwg.mxu0
    %vm1321 = vcmask 130048
    %1322 = vst.msk [vmem:[#allocation8] sm:$0xff] %vm1321, %v1318
    // Predicated region
    $region42: #{tpu_custom_call.1} parent=1 // pred_check
      _
    $region43: #{tpu_custom_call.1} parent=1 // pred_check_branch
      %1324 = sbr.rel (0) target = $region45
    $region44: #{tpu_custom_call.1} parent=1 // pred_region
      %1326 = vsyncadd [#allocation4], 0
      %s1328 = sshll.u32 [#allocation8], 4
      %s1329 = int_to_ptr.vmem [resolvable:$true] %s1328
      %s1330 = sshll.u32 %s7, 4
      %s1331 = int_to_ptr.hbm [resolvable:$true] %s1330
      %1333 = dma.vmem_to_hbm [thread:$0]  %s1329, 128, %s1331, [#allocation4]
    $region45: #{tpu_custom_call.1} parent=1 // pred_fallthru
      _
    // Predicated region
    $region46: #{tpu_custom_call.1} parent=1 // pred_check
      _
    $region47: #{tpu_custom_call.1} parent=1 // pred_check_branch
      %1335 = sbr.rel (0) target = $region49
    $region48: #{tpu_custom_call.1} parent=1 // pred_region
      %1337 = dma.done [#allocation4], 128
    $region49: #{tpu_custom_call.1} parent=1 // pred_fallthru
      _
    %1338 = vsyncpa [#allocation3], 1
    %1339 = vsyncpa [#allocation6], 1
    %1340 = vsyncpa [#allocation4], 1

</llo_original>
